<compile_context>
chip_gen: v5e
topology: v5e:2x2
jax: 0.10.0
libtpu: 0.0.40
codegen_flags: <defaults>
</compile_context>

<pallas_src>
import jax
import jax.numpy as jnp
from jax.experimental import pallas as pl
from jax.experimental.pallas import tpu as pltpu

EPS = 1e-5


def _bn_kernel(x_ref, gamma_ref, beta_ref, o_ref):
    # x_ref: (N, bc, HW) fp32;  gamma_ref / beta_ref: (bc, 1);  o_ref: (N, bc, HW)
    x = x_ref[...].astype(jnp.float32)
    n, bc, hw = x.shape
    inv_r = 1.0 / float(n * hw)

    # Fused statistics sweep: sum and sum-of-squares in one pass over x.
    s = jnp.sum(x, axis=-1, keepdims=True)        # (N, bc, 1)   lane (XLU) reduce
    ss = jnp.sum(x * x, axis=-1, keepdims=True)   # (N, bc, 1)
    s = jnp.sum(s, axis=0, keepdims=True)         # (1, bc, 1)   batch reduce
    ss = jnp.sum(ss, axis=0, keepdims=True)       # (1, bc, 1)

    mean = s * inv_r
    # Biased variance via E[x^2] - mean^2; clamp to guard cancellation.
    var = jnp.maximum(ss * inv_r - mean * mean, 0.0)
    inv_std = jax.lax.rsqrt(var + EPS)

    scale = gamma_ref[...].astype(jnp.float32) * inv_std          # (1, bc, 1)
    shift = beta_ref[...].astype(jnp.float32) - mean * scale      # (1, bc, 1)
    o_ref[...] = (x * scale + shift).astype(o_ref.dtype)


def batchnorm2d_pallas(x_nchw, gamma, beta, *, block_c=64):
    """x_nchw: (N, C, H, W); gamma, beta: (C,). Returns (N, C, H, W)."""
    N, C, H, W = x_nchw.shape
    HW = H * W

    # Channel tile must divide C and be a sublane multiple; otherwise use full C.
    if C % block_c != 0 or block_c % 8 != 0:
        block_c = C
    grid = (C // block_c,)

    # NCHW -> (N, C, H*W): contiguous, free reshape (no transpose / HBM round trip).
    x3d = x_nchw.reshape(N, C, HW)
    gamma2d = gamma.reshape(C, 1).astype(jnp.float32)
    beta2d = beta.reshape(C, 1).astype(jnp.float32)

    out3d = pl.pallas_call(
        _bn_kernel,
        out_shape=jax.ShapeDtypeStruct((N, C, HW), x_nchw.dtype),
        grid_spec=pltpu.PrefetchScalarGridSpec(
            num_scalar_prefetch=0,
            grid=grid,
            in_specs=[
                pl.BlockSpec((N, block_c, HW), lambda i: (0, i, 0)),
                pl.BlockSpec((block_c, 1), lambda i: (i, 0)),
                pl.BlockSpec((block_c, 1), lambda i: (i, 0)),
            ],
            out_specs=pl.BlockSpec((N, block_c, HW), lambda i: (0, i, 0)),
        ),
        compiler_params=pltpu.CompilerParams(
            dimension_semantics=("parallel",),
            vmem_limit_bytes=16 * 1024 * 1024,
        ),
    )(x3d, gamma2d, beta2d)

    # (N, C, H*W) -> NCHW: free reshape.
    return out3d.reshape(N, C, H, W)


def batchnorm2d_ref(x_nchw, gamma, beta):
    """Pure-JAX reference: training-mode BatchNorm2d (batch stats, biased var)."""
    x = x_nchw.astype(jnp.float32)
    mean = jnp.mean(x, axis=(0, 2, 3), keepdims=True)
    var = jnp.mean((x - mean) ** 2, axis=(0, 2, 3), keepdims=True)
    g = gamma.reshape(1, -1, 1, 1)
    b = beta.reshape(1, -1, 1, 1)
    return ((x - mean) * jax.lax.rsqrt(var + EPS) * g + b).astype(x_nchw.dtype)


if __name__ == "__main__":
    # Module spec: input (1, 576, 28, 28), BatchNorm2d over 576 channels.
    N, C, H, W = 1, 576, 28, 28
    key = jax.random.PRNGKey(0)
    x = jax.random.normal(key, (N, C, H, W), dtype=jnp.float32)

    # PyTorch BatchNorm2d default parameter init: weight=1, bias=0.
    gamma = jnp.ones((C,), dtype=jnp.float32)
    beta = jnp.zeros((C,), dtype=jnp.float32)

    out = batchnorm2d_pallas(x, gamma, beta)
    out = jax.block_until_ready(out)

    ref = jax.block_until_ready(batchnorm2d_ref(x, gamma, beta))
    assert out.shape == (N, C, H, W)
    assert jnp.allclose(out, ref, atol=1e-4, rtol=1e-4)

    print("KERNEL_OK")
</pallas_src>

<mosaic_0001>
module attributes {stable_mosaic.version = 11 : i64} {
  func.func @_bn_kernel(%arg0: i32, %arg1: memref<1x64x784xf32, #tpu.memory_space<vmem>>, %arg2: memref<64x1xf32, #tpu.memory_space<vmem>>, %arg3: memref<64x1xf32, #tpu.memory_space<vmem>>, %arg4: memref<1x64x784xf32, #tpu.memory_space<vmem>>) attributes {dimension_semantics = [#tpu.dimension_semantics<parallel>], iteration_bounds = array<i64: 9>, scalar_prefetch = 0 : i64, scratch_operands = 0 : i64, tpu.core_type = #tpu.core_type<tc>, window_params = [{transform_indices = @transform_0, window_bounds = array<i64: 1, 64, 784>}, {transform_indices = @transform_1, window_bounds = array<i64: 64, 1>}, {transform_indices = @transform_2, window_bounds = array<i64: 64, 1>}, {transform_indices = @transform_3, window_bounds = array<i64: 1, 64, 784>}]} {
    %c0 = arith.constant 0 : index
    %c0_0 = arith.constant 0 : index
    %c0_1 = arith.constant 0 : index
    %0 = vector.load %arg1[%c0, %c0_0, %c0_1] : memref<1x64x784xf32, #tpu.memory_space<vmem>>, vector<1x64x784xf32>
    %cst = arith.constant dense<0.000000e+00> : vector<1x64xf32>
    %1 = vector.multi_reduction <add>, %0, %cst [2] : vector<1x64x784xf32> to vector<1x64xf32>
    %2 = vector.shape_cast %1 : vector<1x64xf32> to vector<1x64x1xf32>
    %3 = arith.mulf %0, %0 : vector<1x64x784xf32>
    %cst_2 = arith.constant dense<0.000000e+00> : vector<1x64xf32>
    %4 = vector.multi_reduction <add>, %3, %cst_2 [2] : vector<1x64x784xf32> to vector<1x64xf32>
    %5 = vector.shape_cast %4 : vector<1x64xf32> to vector<1x64x1xf32>
    %cst_3 = arith.constant dense<0.000000e+00> : vector<64x1xf32>
    %6 = vector.multi_reduction <add>, %2, %cst_3 [0] : vector<1x64x1xf32> to vector<64x1xf32>
    %7 = vector.shape_cast %6 : vector<64x1xf32> to vector<1x64x1xf32>
    %cst_4 = arith.constant dense<0.000000e+00> : vector<64x1xf32>
    %8 = vector.multi_reduction <add>, %5, %cst_4 [0] : vector<1x64x1xf32> to vector<64x1xf32>
    %9 = vector.shape_cast %8 : vector<64x1xf32> to vector<1x64x1xf32>
    %cst_5 = arith.constant 0.00127551018 : f32
    %10 = vector.broadcast %cst_5 : f32 to vector<1x64x1xf32>
    %11 = arith.mulf %7, %10 : vector<1x64x1xf32>
    %cst_6 = arith.constant 0.00127551018 : f32
    %12 = vector.broadcast %cst_6 : f32 to vector<1x64x1xf32>
    %13 = arith.mulf %9, %12 : vector<1x64x1xf32>
    %14 = arith.mulf %11, %11 : vector<1x64x1xf32>
    %15 = arith.subf %13, %14 : vector<1x64x1xf32>
    %cst_7 = arith.constant 0.000000e+00 : f32
    %16 = vector.broadcast %cst_7 : f32 to vector<1x64x1xf32>
    %17 = arith.maximumf %15, %16 : vector<1x64x1xf32>
    %cst_8 = arith.constant 9.99999974E-6 : f32
    %18 = vector.broadcast %cst_8 : f32 to vector<1x64x1xf32>
    %19 = arith.addf %17, %18 : vector<1x64x1xf32>
    %20 = math.rsqrt %19 : vector<1x64x1xf32>
    %c0_9 = arith.constant 0 : index
    %c0_10 = arith.constant 0 : index
    %21 = vector.load %arg2[%c0_9, %c0_10] : memref<64x1xf32, #tpu.memory_space<vmem>>, vector<64x1xf32>
    %22 = vector.shape_cast %21 : vector<64x1xf32> to vector<1x64x1xf32>
    %23 = arith.mulf %22, %20 : vector<1x64x1xf32>
    %c0_11 = arith.constant 0 : index
    %c0_12 = arith.constant 0 : index
    %24 = vector.load %arg3[%c0_11, %c0_12] : memref<64x1xf32, #tpu.memory_space<vmem>>, vector<64x1xf32>
    %25 = arith.mulf %11, %23 : vector<1x64x1xf32>
    %26 = vector.shape_cast %24 : vector<64x1xf32> to vector<1x64x1xf32>
    %27 = arith.subf %26, %25 : vector<1x64x1xf32>
    %28 = vector.broadcast %23 : vector<1x64x1xf32> to vector<1x64x784xf32>
    %29 = arith.mulf %0, %28 : vector<1x64x784xf32>
    %30 = vector.broadcast %27 : vector<1x64x1xf32> to vector<1x64x784xf32>
    %31 = arith.addf %29, %30 : vector<1x64x784xf32>
    %c0_13 = arith.constant 0 : index
    %c0_14 = arith.constant 0 : index
    %c0_15 = arith.constant 0 : index
    %32 = vector.load %arg4[%c0_13, %c0_14, %c0_15] : memref<1x64x784xf32, #tpu.memory_space<vmem>>, vector<1x64x784xf32>
    tpu.vector_store %arg4[%c0_13, %c0_14, %c0_15], %31 {strides = array<i32>} : memref<1x64x784xf32, #tpu.memory_space<vmem>>, vector<1x64x784xf32>,
    return
  }
  func.func @transform_0(%arg0: i32) -> (i32, i32, i32) {
    %c0_i32 = arith.constant 0 : i32
    %c0_i32_0 = arith.constant 0 : i32
    %c0_i32_1 = arith.constant 0 : i32
    return %c0_i32, %arg0, %c0_i32_0 : i32, i32, i32
  }
  func.func @transform_1(%arg0: i32) -> (i32, i32) {
    %c0_i32 = arith.constant 0 : i32
    %c0_i32_0 = arith.constant 0 : i32
    return %arg0, %c0_i32 : i32, i32
  }
  func.func @transform_2(%arg0: i32) -> (i32, i32) {
    %c0_i32 = arith.constant 0 : i32
    %c0_i32_0 = arith.constant 0 : i32
    return %arg0, %c0_i32 : i32, i32
  }
  func.func @transform_3(%arg0: i32) -> (i32, i32, i32) {
    %c0_i32 = arith.constant 0 : i32
    %c0_i32_0 = arith.constant 0 : i32
    %c0_i32_1 = arith.constant 0 : i32
    return %c0_i32, %arg0, %c0_i32_0 : i32, i32, i32
  }
}

</mosaic_0001>

<llo_original>
// kernel: tpu_custom_call.1
$region0: #{tpu_custom_call.1}
  #allocation0 [shape = 'u32[]', space=smem, size = 0x4, offset = 0x4, fixed_abs, tag = 'smem constant byte address 0x4 - core index']
  #allocation1 [shape = 'u32[72,128]{1,0:T(1,128)}', space=vmem, size = 0x9000, scoped, tag = 'internal scratch']
  %s0 = inlined_call_operand.vmem [shape: f32[1,576,784], index: 0, kind: input, shape index: {}]
  %s1 = inlined_call_operand.vmem [shape: f32[576,1], index: 1, kind: input, shape index: {}]
  %s2 = inlined_call_operand.vmem [shape: f32[576,1], index: 2, kind: input, shape index: {}]
  %s3 = inlined_call_operand.vmem [shape: f32[1,576,784], index: 3, kind: output, shape index: {}]
  %s4 = sld [smem:[#allocation0]]
  $region45: #{tpu_custom_call.1} parent=0
    _
  %s6 = ssub.s32 1, %s4
  %s7 = scalar_select 0, %s6, %s4
  loop: start=0, step=1, limit=11
  $region2: #{tpu_custom_call.1} parent=0 // loop_pre_header
    _
  $region3: #{tpu_custom_call.1} parent=0 // loop_header
    %s9 = sphi 0, %s13
    %p10 = scmp.ge.s32.totalorder %s9, 11
    %s19 = sphi 0, %s21
    %s22 = sphi 0, %s19
    %s23 = sphi 0, %s22
    %s39 = sphi 0, %s23
    %s45 = sphi 0, %s47
    %s48 = sphi 0, %s45
    %s49 = sphi 0, %s48
    %s65 = sphi 0, %s49
    %s71 = sphi 0, %s73
    %s74 = sphi 0, %s71
    %s75 = sphi 0, %s74
    %s91 = sphi 0, %s75
    %s97 = sphi 0, %s99
    %s100 = sphi 0, %s97
    %s101 = sphi 0, %s100
    %s117 = sphi 0, %s101
  $region4: #{tpu_custom_call.1} parent=0 // loop_header_branch
    %12 = sbr.rel (%p10) target = $region8
  $region5: #{tpu_custom_call.1} parent=0 // loop_body
    %s14 = ssub.s32 %s9, 1
    %s15 = ssub.s32 %s9, 2
    %s16 = sadd.s32 %s9, 1
    %s17 = ssub.s32 %s9, %s16
    %p18 = scmp.eq.s32.totalorder %s17, 0
    %s20 = sadd.s32 %s19, 1
    %s21 = scalar_select %p18, %s19, %s20
    %p24 = pneg %p18
    %p25 = scmp.eq.s32.totalorder %s9, 8
    %p26 = por %p24, %p25
    %p27 = scmp.ne.s32.totalorder %s19, %s22
    %p28 = scmp.eq.s32.totalorder %s9, 0
    %p29 = por %p27, %p28
    %p30 = scmp.ne.s32.totalorder %s19, %s22
    %p31 = scmp.eq.s32.totalorder %s14, 8
    %p32 = por %p30, %p31
    %p33 = scmp.ne.s32.totalorder %s22, %s23
    %p34 = scmp.eq.s32.totalorder %s14, 0
    %p35 = por %p33, %p34
    %p36 = scmp.ne.s32.totalorder %s22, %s23
    %p37 = scmp.eq.s32.totalorder %s15, 8
    %p38 = por %p36, %p37
    %p40 = scmp.ne.s32.totalorder %s23, %s39
    %p41 = scmp.eq.s32.totalorder %s15, 0
    %p42 = por %p40, %p41
    %s43 = ssub.s32 %s9, %s16
    %p44 = scmp.eq.s32.totalorder %s43, 0
    %s46 = sadd.s32 %s45, 1
    %s47 = scalar_select %p44, %s45, %s46
    %p50 = pneg %p44
    %p51 = scmp.eq.s32.totalorder %s9, 8
    %p52 = por %p50, %p51
    %p53 = scmp.ne.s32.totalorder %s45, %s48
    %p54 = scmp.eq.s32.totalorder %s9, 0
    %p55 = por %p53, %p54
    %p56 = scmp.ne.s32.totalorder %s45, %s48
    %p57 = scmp.eq.s32.totalorder %s14, 8
    %p58 = por %p56, %p57
    %p59 = scmp.ne.s32.totalorder %s48, %s49
    %p60 = scmp.eq.s32.totalorder %s14, 0
    %p61 = por %p59, %p60
    %p62 = scmp.ne.s32.totalorder %s48, %s49
    %p63 = scmp.eq.s32.totalorder %s15, 8
    %p64 = por %p62, %p63
    %p66 = scmp.ne.s32.totalorder %s49, %s65
    %p67 = scmp.eq.s32.totalorder %s15, 0
    %p68 = por %p66, %p67
    %s69 = ssub.s32 %s9, %s16
    %p70 = scmp.eq.s32.totalorder %s69, 0
    %s72 = sadd.s32 %s71, 1
    %s73 = scalar_select %p70, %s71, %s72
    %p76 = pneg %p70
    %p77 = scmp.eq.s32.totalorder %s9, 8
    %p78 = por %p76, %p77
    %p79 = scmp.ne.s32.totalorder %s71, %s74
    %p80 = scmp.eq.s32.totalorder %s9, 0
    %p81 = por %p79, %p80
    %p82 = scmp.ne.s32.totalorder %s71, %s74
    %p83 = scmp.eq.s32.totalorder %s14, 8
    %p84 = por %p82, %p83
    %p85 = scmp.ne.s32.totalorder %s74, %s75
    %p86 = scmp.eq.s32.totalorder %s14, 0
    %p87 = por %p85, %p86
    %p88 = scmp.ne.s32.totalorder %s74, %s75
    %p89 = scmp.eq.s32.totalorder %s15, 8
    %p90 = por %p88, %p89
    %p92 = scmp.ne.s32.totalorder %s75, %s91
    %p93 = scmp.eq.s32.totalorder %s15, 0
    %p94 = por %p92, %p93
    %s95 = ssub.s32 %s9, %s16
    %p96 = scmp.eq.s32.totalorder %s95, 0
    %s98 = sadd.s32 %s97, 1
    %s99 = scalar_select %p96, %s97, %s98
    %p102 = pneg %p96
    %p103 = scmp.eq.s32.totalorder %s9, 8
    %p104 = por %p102, %p103
    %p105 = scmp.ne.s32.totalorder %s97, %s100
    %p106 = scmp.eq.s32.totalorder %s9, 0
    %p107 = por %p105, %p106
    %p108 = scmp.ne.s32.totalorder %s97, %s100
    %p109 = scmp.eq.s32.totalorder %s14, 8
    %p110 = por %p108, %p109
    %p111 = scmp.ne.s32.totalorder %s100, %s101
    %p112 = scmp.eq.s32.totalorder %s14, 0
    %p113 = por %p111, %p112
    %p114 = scmp.ne.s32.totalorder %s100, %s101
    %p115 = scmp.eq.s32.totalorder %s15, 8
    %p116 = por %p114, %p115
    %p118 = scmp.ne.s32.totalorder %s101, %s117
    %p119 = scmp.eq.s32.totalorder %s15, 0
    %p120 = por %p118, %p119
    %p121 = scmp.le.s32.totalorder 1, %s9
    %p122 = scmp.lt.s32.totalorder %s9, 10
    %p123 = pnand %p121, %p122
    %p124 = pneg %p123
    // Predicated region
    $region9: #{tpu_custom_call.1} parent=5 // pred_check
      _
    $region10: #{tpu_custom_call.1} parent=5 // pred_check_branch
      %126 = sbr.rel (%p123) target = $region12
    $region11: #{tpu_custom_call.1} parent=5 // pred_region
      %s127 = ssub.s32 %s9, 1
    $region12: #{tpu_custom_call.1} parent=5 // pred_fallthru
      _
    %p128 = scmp.lt.s32.totalorder %s9, 9
    // Predicated region
    $region13: #{tpu_custom_call.1} parent=5 // pred_check
      %p129 = pneg %p128
    $region14: #{tpu_custom_call.1} parent=5 // pred_check_branch
      %131 = sbr.rel (%p129) target = $region16
    $region15: #{tpu_custom_call.1} parent=5 // pred_region
      // Predicated region
      $region17: #{tpu_custom_call.1} parent=15 // pred_check
        %p132 = pneg %p29
      $region18: #{tpu_custom_call.1} parent=15 // pred_check_branch
        %134 = sbr.rel (%p132) target = $region20
      $region19: #{tpu_custom_call.1} parent=15 // pred_region
        %s135 = smul.u32 8, %s9
        %p136 = scmp.lt.s32.totalorder %s135, 71
        %s137 = scalar_select %p136, %s135, 71
        %s138 = smul.addr %s137, 7
        %s139 = smul.addr %s138, 8
        %s140 = scalar_lea.vmem %s0, %s139
        %s141 = smul.u32 8, %s9
      $region20: #{tpu_custom_call.1} parent=15 // pred_fallthru
        _
      // Predicated region
      $region21: #{tpu_custom_call.1} parent=15 // pred_check
        %p142 = pneg %p55
      $region22: #{tpu_custom_call.1} parent=15 // pred_check_branch
        %144 = sbr.rel (%p142) target = $region24
      $region23: #{tpu_custom_call.1} parent=15 // pred_region
        %s145 = smul.u32 8, %s9
        %p146 = scmp.lt.s32.totalorder %s145, 71
        %s147 = scalar_select %p146, %s145, 71
        %s148 = smul.addr %s147, 8
        %s149 = scalar_lea.vmem %s1, %s148
        %s150 = smul.u32 8, %s9
      $region24: #{tpu_custom_call.1} parent=15 // pred_fallthru
        _
      // Predicated region
      $region25: #{tpu_custom_call.1} parent=15 // pred_check
        %p151 = pneg %p81
      $region26: #{tpu_custom_call.1} parent=15 // pred_check_branch
        %153 = sbr.rel (%p151) target = $region28
      $region27: #{tpu_custom_call.1} parent=15 // pred_region
        %s154 = smul.u32 8, %s9
        %p155 = scmp.lt.s32.totalorder %s154, 71
        %s156 = scalar_select %p155, %s154, 71
        %s157 = smul.addr %s156, 8
        %s158 = scalar_lea.vmem %s2, %s157
        %s159 = smul.u32 8, %s9
      $region28: #{tpu_custom_call.1} parent=15 // pred_fallthru
        _
    $region16: #{tpu_custom_call.1} parent=5 // pred_fallthru
      _
    %p160 = scmp.le.s32.totalorder 1, %s9
    %p161 = scmp.lt.s32.totalorder %s9, 10
    %p162 = pnand %p160, %p161
    %p163 = pneg %p162
    // Predicated region
    $region29: #{tpu_custom_call.1} parent=5 // pred_check
      _
    $region30: #{tpu_custom_call.1} parent=5 // pred_check_branch
      %165 = sbr.rel (%p162) target = $region32
    $region31: #{tpu_custom_call.1} parent=5 // pred_region
      %s166 = ssub.s32 %s9, 1
      %s167 = smul.u32 8, %s14
      %p168 = scmp.lt.s32.totalorder %s167, 71
      %s169 = scalar_select %p168, %s167, 71
      %s170 = smul.addr %s169, 7
      %s171 = smul.addr %s170, 8
      %s172 = scalar_lea.vmem %s0, %s171
      %p173 = pneg %p35
      %p174 = pneg %p32
      %s175 = smul.u32 8, %s14
      %p176 = scmp.lt.s32.totalorder %s175, 71
      %s177 = scalar_select %p176, %s175, 71
      %s178 = smul.addr %s177, 8
      %s179 = scalar_lea.vmem %s1, %s178
      %p180 = pneg %p61
      %p181 = pneg %p58
      %s182 = smul.u32 8, %s14
      %p183 = scmp.lt.s32.totalorder %s182, 71
      %s184 = scalar_select %p183, %s182, 71
      %s185 = smul.addr %s184, 8
      %s186 = scalar_lea.vmem %s2, %s185
      %p187 = pneg %p87
      %p188 = pneg %p84
      %p189 = pneg %p113
      %p190 = pneg %p110
      %s191 = smul.u32 8, %s14
      %p192 = scmp.lt.s32.totalorder %s191, 71
      %s193 = scalar_select %p192, %s191, 71
      %s194 = smul.addr %s193, 7
      %s195 = smul.addr %s194, 8
      %s196 = scalar_lea.vmem %s3, %s195
      %s197 = smul.u32 8, %s14
      %p198 = scmp.lt.s32.totalorder %s197, 71
      %s199 = scalar_select %p198, %s197, 71
      %s200 = smul.addr %s199, 7
      %s201 = smul.addr %s200, 8
      %s202 = scalar_lea.vmem %s0, %s201
      %s203 = smul.u32 8, %s14
      %s204 = smul.u32 8, %s14
      %p205 = scmp.lt.s32.totalorder %s204, 71
      %s206 = scalar_select %p205, %s204, 71
      %s207 = smul.addr %s206, 8
      %s208 = scalar_lea.vmem %s1, %s207
      %s209 = smul.u32 8, %s14
      %s210 = smul.u32 8, %s14
      %p211 = scmp.lt.s32.totalorder %s210, 71
      %s212 = scalar_select %p211, %s210, 71
      %s213 = smul.addr %s212, 8
      %s214 = scalar_lea.vmem %s2, %s213
      %s215 = smul.u32 8, %s14
      %s216 = smul.u32 8, %s14
      %p217 = scmp.lt.s32.totalorder %s216, 71
      %s218 = scalar_select %p217, %s216, 71
      %s219 = smul.addr %s218, 7
      %s220 = smul.addr %s219, 8
      %s221 = scalar_lea.vmem %s3, %s220
      %s222 = smul.u32 8, %s14
      %v223 = vld [vmem:[%s202] sm:$0xff]
      %v224 = vld [vmem:[%s202 + $0x8] sm:$0xff]
      %v225 = vld [vmem:[%s202 + $0x10] sm:$0xff]
      %v226 = vld [vmem:[%s202 + $0x18] sm:$0xff]
      %v227 = vld [vmem:[%s202 + $0x20] sm:$0xff]
      %v228 = vld [vmem:[%s202 + $0x28] sm:$0xff]
      %v229 = vld [vmem:[%s202 + $0x30] sm:$0xff]
      %v230 = vld [vmem:[%s202 + $0x38] sm:$0xff]
      %v231 = vld [vmem:[%s202 + $0x40] sm:$0xff]
      %v232 = vld [vmem:[%s202 + $0x48] sm:$0xff]
      %v233 = vld [vmem:[%s202 + $0x50] sm:$0xff]
      %v234 = vld [vmem:[%s202 + $0x58] sm:$0xff]
      %v235 = vld [vmem:[%s202 + $0x60] sm:$0xff]
      %v236 = vld [vmem:[%s202 + $0x68] sm:$0xff]
      %v237 = vld [vmem:[%s202 + $0x70] sm:$0xff]
      %v238 = vld [vmem:[%s202 + $0x78] sm:$0xff]
      %v239 = vld [vmem:[%s202 + $0x80] sm:$0xff]
      %v240 = vld [vmem:[%s202 + $0x88] sm:$0xff]
      %v241 = vld [vmem:[%s202 + $0x90] sm:$0xff]
      %v242 = vld [vmem:[%s202 + $0x98] sm:$0xff]
      %v243 = vld [vmem:[%s202 + $0xa0] sm:$0xff]
      %v244 = vld [vmem:[%s202 + $0xa8] sm:$0xff]
      %v245 = vld [vmem:[%s202 + $0xb0] sm:$0xff]
      %v246 = vld [vmem:[%s202 + $0xb8] sm:$0xff]
      %v247 = vld [vmem:[%s202 + $0xc0] sm:$0xff]
      %v248 = vld [vmem:[%s202 + $0xc8] sm:$0xff]
      %v249 = vld [vmem:[%s202 + $0xd0] sm:$0xff]
      %v250 = vld [vmem:[%s202 + $0xd8] sm:$0xff]
      %v251 = vld [vmem:[%s202 + $0xe0] sm:$0xff]
      %v252 = vld [vmem:[%s202 + $0xe8] sm:$0xff]
      %v253 = vld [vmem:[%s202 + $0xf0] sm:$0xff]
      %v254 = vld [vmem:[%s202 + $0xf8] sm:$0xff]
      %v255 = vld [vmem:[%s202 + $0x100] sm:$0xff]
      %v256 = vld [vmem:[%s202 + $0x108] sm:$0xff]
      %v257 = vld [vmem:[%s202 + $0x110] sm:$0xff]
      %v258 = vld [vmem:[%s202 + $0x118] sm:$0xff]
      %v259 = vld [vmem:[%s202 + $0x120] sm:$0xff]
      %v260 = vld [vmem:[%s202 + $0x128] sm:$0xff]
      %v261 = vld [vmem:[%s202 + $0x130] sm:$0xff]
      %v262 = vld [vmem:[%s202 + $0x138] sm:$0xff]
      %v263 = vld [vmem:[%s202 + $0x140] sm:$0xff]
      %v264 = vld [vmem:[%s202 + $0x148] sm:$0xff]
      %v265 = vld [vmem:[%s202 + $0x150] sm:$0xff]
      %v266 = vld [vmem:[%s202 + $0x158] sm:$0xff]
      %v267 = vld [vmem:[%s202 + $0x160] sm:$0xff]
      %v268 = vld [vmem:[%s202 + $0x168] sm:$0xff]
      %v269 = vld [vmem:[%s202 + $0x170] sm:$0xff]
      %v270 = vld [vmem:[%s202 + $0x178] sm:$0xff]
      %v271 = vld [vmem:[%s202 + $0x180] sm:$0xff]
      %v272 = vld [vmem:[%s202 + $0x188] sm:$0xff]
      %v273 = vld [vmem:[%s202 + $0x190] sm:$0xff]
      %v274 = vld [vmem:[%s202 + $0x198] sm:$0xff]
      %v275 = vld [vmem:[%s202 + $0x1a0] sm:$0xff]
      %v276 = vld [vmem:[%s202 + $0x1a8] sm:$0xff]
      %v277 = vld [vmem:[%s202 + $0x1b0] sm:$0xff]
      %v278 = vld [vmem:[%s202 + $0x1b8] sm:$0xff]
      %v279 = vadd.f32 %v223, %v224
      %v280 = vadd.f32 %v279, %v225
      %v281 = vadd.f32 %v280, %v226
      %v282 = vadd.f32 %v281, %v227
      %v283 = vadd.f32 %v282, %v228
      %vm284 = vcmask 130048
      %v285 = vsel %vm284, %v229, 0.0
      %v286 = vadd.f32 %v283, %v285
      %287 = vadd.xlane.f32.xlu0 %v286
      %v288 = vpop.xlane.xlu0 %287
      %v289 = vadd.f32 %v230, %v231
      %v290 = vadd.f32 %v289, %v232
      %v291 = vadd.f32 %v290, %v233
      %v292 = vadd.f32 %v291, %v234
      %v293 = vadd.f32 %v292, %v235
      %v294 = vsel %vm284, %v236, 0.0
      %v295 = vadd.f32 %v293, %v294
      %296 = vadd.xlane.f32.xlu0 %v295
      %v297 = vpop.xlane.xlu0 %296
      %v298 = vadd.f32 %v237, %v238
      %v299 = vadd.f32 %v298, %v239
      %v300 = vadd.f32 %v299, %v240
      %v301 = vadd.f32 %v300, %v241
      %v302 = vadd.f32 %v301, %v242
      %v303 = vsel %vm284, %v243, 0.0
      %v304 = vadd.f32 %v302, %v303
      %305 = vadd.xlane.f32.xlu0 %v304
      %v306 = vpop.xlane.xlu0 %305
      %v307 = vadd.f32 %v244, %v245
      %v308 = vadd.f32 %v307, %v246
      %v309 = vadd.f32 %v308, %v247
      %v310 = vadd.f32 %v309, %v248
      %v311 = vadd.f32 %v310, %v249
      %v312 = vsel %vm284, %v250, 0.0
      %v313 = vadd.f32 %v311, %v312
      %314 = vadd.xlane.f32.xlu0 %v313
      %v315 = vpop.xlane.xlu0 %314
      %v316 = vadd.f32 %v251, %v252
      %v317 = vadd.f32 %v316, %v253
      %v318 = vadd.f32 %v317, %v254
      %v319 = vadd.f32 %v318, %v255
      %v320 = vadd.f32 %v319, %v256
      %v321 = vsel %vm284, %v257, 0.0
      %v322 = vadd.f32 %v320, %v321
      %323 = vadd.xlane.f32.xlu0 %v322
      %v324 = vpop.xlane.xlu0 %323
      %v325 = vadd.f32 %v258, %v259
      %v326 = vadd.f32 %v325, %v260
      %v327 = vadd.f32 %v326, %v261
      %v328 = vadd.f32 %v327, %v262
      %v329 = vadd.f32 %v328, %v263
      %v330 = vsel %vm284, %v264, 0.0
      %v331 = vadd.f32 %v329, %v330
      %332 = vadd.xlane.f32.xlu0 %v331
      %v333 = vpop.xlane.xlu0 %332
      %v334 = vadd.f32 %v265, %v266
      %v335 = vadd.f32 %v334, %v267
      %v336 = vadd.f32 %v335, %v268
      %v337 = vadd.f32 %v336, %v269
      %v338 = vadd.f32 %v337, %v270
      %v339 = vsel %vm284, %v271, 0.0
      %v340 = vadd.f32 %v338, %v339
      %341 = vadd.xlane.f32.xlu0 %v340
      %v342 = vpop.xlane.xlu0 %341
      %v343 = vadd.f32 %v272, %v273
      %v344 = vadd.f32 %v343, %v274
      %v345 = vadd.f32 %v344, %v275
      %v346 = vadd.f32 %v345, %v276
      %v347 = vadd.f32 %v346, %v277
      %v348 = vsel %vm284, %v278, 0.0
      %v349 = vadd.f32 %v347, %v348
      %350 = vadd.xlane.f32.xlu0 %v349
      %v351 = vpop.xlane.xlu0 %350
      %v352 = vmul.f32 %v223, %v223
      %v353 = vmul.f32 %v224, %v224
      %v354 = vmul.f32 %v225, %v225
      %v355 = vmul.f32 %v226, %v226
      %v356 = vmul.f32 %v227, %v227
      %v357 = vmul.f32 %v228, %v228
      %v358 = vmul.f32 %v229, %v229
      %v359 = vmul.f32 %v230, %v230
      %v360 = vmul.f32 %v231, %v231
      %v361 = vmul.f32 %v232, %v232
      %v362 = vmul.f32 %v233, %v233
      %v363 = vmul.f32 %v234, %v234
      %v364 = vmul.f32 %v235, %v235
      %v365 = vmul.f32 %v236, %v236
      %v366 = vmul.f32 %v237, %v237
      %v367 = vmul.f32 %v238, %v238
      %v368 = vmul.f32 %v239, %v239
      %v369 = vmul.f32 %v240, %v240
      %v370 = vmul.f32 %v241, %v241
      %v371 = vmul.f32 %v242, %v242
      %v372 = vmul.f32 %v243, %v243
      %v373 = vmul.f32 %v244, %v244
      %v374 = vmul.f32 %v245, %v245
      %v375 = vmul.f32 %v246, %v246
      %v376 = vmul.f32 %v247, %v247
      %v377 = vmul.f32 %v248, %v248
      %v378 = vmul.f32 %v249, %v249
      %v379 = vmul.f32 %v250, %v250
      %v380 = vmul.f32 %v251, %v251
      %v381 = vmul.f32 %v252, %v252
      %v382 = vmul.f32 %v253, %v253
      %v383 = vmul.f32 %v254, %v254
      %v384 = vmul.f32 %v255, %v255
      %v385 = vmul.f32 %v256, %v256
      %v386 = vmul.f32 %v257, %v257
      %v387 = vmul.f32 %v258, %v258
      %v388 = vmul.f32 %v259, %v259
      %v389 = vmul.f32 %v260, %v260
      %v390 = vmul.f32 %v261, %v261
      %v391 = vmul.f32 %v262, %v262
      %v392 = vmul.f32 %v263, %v263
      %v393 = vmul.f32 %v264, %v264
      %v394 = vmul.f32 %v265, %v265
      %v395 = vmul.f32 %v266, %v266
      %v396 = vmul.f32 %v267, %v267
      %v397 = vmul.f32 %v268, %v268
      %v398 = vmul.f32 %v269, %v269
      %v399 = vmul.f32 %v270, %v270
      %v400 = vmul.f32 %v271, %v271
      %v401 = vmul.f32 %v272, %v272
      %v402 = vmul.f32 %v273, %v273
      %v403 = vmul.f32 %v274, %v274
      %v404 = vmul.f32 %v275, %v275
      %v405 = vmul.f32 %v276, %v276
      %v406 = vmul.f32 %v277, %v277
      %v407 = vmul.f32 %v278, %v278
      %v408 = vadd.f32 %v352, %v353
      %v409 = vadd.f32 %v408, %v354
      %v410 = vadd.f32 %v409, %v355
      %v411 = vadd.f32 %v410, %v356
      %v412 = vadd.f32 %v411, %v357
      %v413 = vsel %vm284, %v358, 0.0
      %v414 = vadd.f32 %v412, %v413
      %415 = vadd.xlane.f32.xlu0 %v414
      %v416 = vpop.xlane.xlu0 %415
      %v417 = vadd.f32 %v359, %v360
      %v418 = vadd.f32 %v417, %v361
      %v419 = vadd.f32 %v418, %v362
      %v420 = vadd.f32 %v419, %v363
      %v421 = vadd.f32 %v420, %v364
      %v422 = vsel %vm284, %v365, 0.0
      %v423 = vadd.f32 %v421, %v422
      %424 = vadd.xlane.f32.xlu0 %v423
      %v425 = vpop.xlane.xlu0 %424
      %v426 = vadd.f32 %v366, %v367
      %v427 = vadd.f32 %v426, %v368
      %v428 = vadd.f32 %v427, %v369
      %v429 = vadd.f32 %v428, %v370
      %v430 = vadd.f32 %v429, %v371
      %v431 = vsel %vm284, %v372, 0.0
      %v432 = vadd.f32 %v430, %v431
      %433 = vadd.xlane.f32.xlu0 %v432
      %v434 = vpop.xlane.xlu0 %433
      %v435 = vadd.f32 %v373, %v374
      %v436 = vadd.f32 %v435, %v375
      %v437 = vadd.f32 %v436, %v376
      %v438 = vadd.f32 %v437, %v377
      %v439 = vadd.f32 %v438, %v378
      %v440 = vsel %vm284, %v379, 0.0
      %v441 = vadd.f32 %v439, %v440
      %442 = vadd.xlane.f32.xlu0 %v441
      %v443 = vpop.xlane.xlu0 %442
      %v444 = vadd.f32 %v380, %v381
      %v445 = vadd.f32 %v444, %v382
      %v446 = vadd.f32 %v445, %v383
      %v447 = vadd.f32 %v446, %v384
      %v448 = vadd.f32 %v447, %v385
      %v449 = vsel %vm284, %v386, 0.0
      %v450 = vadd.f32 %v448, %v449
      %451 = vadd.xlane.f32.xlu0 %v450
      %v452 = vpop.xlane.xlu0 %451
      %v453 = vadd.f32 %v387, %v388
      %v454 = vadd.f32 %v453, %v389
      %v455 = vadd.f32 %v454, %v390
      %v456 = vadd.f32 %v455, %v391
      %v457 = vadd.f32 %v456, %v392
      %v458 = vsel %vm284, %v393, 0.0
      %v459 = vadd.f32 %v457, %v458
      %460 = vadd.xlane.f32.xlu0 %v459
      %v461 = vpop.xlane.xlu0 %460
      %v462 = vadd.f32 %v394, %v395
      %v463 = vadd.f32 %v462, %v396
      %v464 = vadd.f32 %v463, %v397
      %v465 = vadd.f32 %v464, %v398
      %v466 = vadd.f32 %v465, %v399
      %v467 = vsel %vm284, %v400, 0.0
      %v468 = vadd.f32 %v466, %v467
      %469 = vadd.xlane.f32.xlu0 %v468
      %v470 = vpop.xlane.xlu0 %469
      %v471 = vadd.f32 %v401, %v402
      %v472 = vadd.f32 %v471, %v403
      %v473 = vadd.f32 %v472, %v404
      %v474 = vadd.f32 %v473, %v405
      %v475 = vadd.f32 %v474, %v406
      %v476 = vsel %vm284, %v407, 0.0
      %v477 = vadd.f32 %v475, %v476
      %478 = vadd.xlane.f32.xlu0 %v477
      %v479 = vpop.xlane.xlu0 %478
      %v480 = vadd.f32 %v288, 0.0
      %v481 = vadd.f32 %v297, 0.0
      %v482 = vadd.f32 %v306, 0.0
      %v483 = vadd.f32 %v315, 0.0
      %v484 = vadd.f32 %v324, 0.0
      %v485 = vadd.f32 %v333, 0.0
      %v486 = vadd.f32 %v342, 0.0
      %v487 = vadd.f32 %v351, 0.0
      %v488 = vadd.f32 %v416, 0.0
      %v489 = vadd.f32 %v425, 0.0
      %v490 = vadd.f32 %v434, 0.0
      %v491 = vadd.f32 %v443, 0.0
      %v492 = vadd.f32 %v452, 0.0
      %v493 = vadd.f32 %v461, 0.0
      %v494 = vadd.f32 %v470, 0.0
      %v495 = vadd.f32 %v479, 0.0
      %v496 = vmul.f32 %v480, 0.0012755102
      %v497 = vmul.f32 %v481, 0.0012755102
      %v498 = vmul.f32 %v482, 0.0012755102
      %v499 = vmul.f32 %v483, 0.0012755102
      %v500 = vmul.f32 %v484, 0.0012755102
      %v501 = vmul.f32 %v485, 0.0012755102
      %v502 = vmul.f32 %v486, 0.0012755102
      %v503 = vmul.f32 %v487, 0.0012755102
      %v504 = vmul.f32 %v488, 0.0012755102
      %v505 = vmul.f32 %v489, 0.0012755102
      %v506 = vmul.f32 %v490, 0.0012755102
      %v507 = vmul.f32 %v491, 0.0012755102
      %v508 = vmul.f32 %v492, 0.0012755102
      %v509 = vmul.f32 %v493, 0.0012755102
      %v510 = vmul.f32 %v494, 0.0012755102
      %v511 = vmul.f32 %v495, 0.0012755102
      %v512 = vmul.f32 %v496, %v496
      %v513 = vmul.f32 %v497, %v497
      %v514 = vmul.f32 %v498, %v498
      %v515 = vmul.f32 %v499, %v499
      %v516 = vmul.f32 %v500, %v500
      %v517 = vmul.f32 %v501, %v501
      %v518 = vmul.f32 %v502, %v502
      %v519 = vmul.f32 %v503, %v503
      %v520 = vsub.f32 %v504, %v512
      %v521 = vsub.f32 %v505, %v513
      %v522 = vsub.f32 %v506, %v514
      %v523 = vsub.f32 %v507, %v515
      %v524 = vsub.f32 %v508, %v516
      %v525 = vsub.f32 %v509, %v517
      %v526 = vsub.f32 %v510, %v518
      %v527 = vsub.f32 %v511, %v519
      %v528 = vmax.f32 %v520, 0.0
      %v529 = vmax.f32 %v521, 0.0
      %v530 = vmax.f32 %v522, 0.0
      %v531 = vmax.f32 %v523, 0.0
      %v532 = vmax.f32 %v524, 0.0
      %v533 = vmax.f32 %v525, 0.0
      %v534 = vmax.f32 %v526, 0.0
      %v535 = vmax.f32 %v527, 0.0
      %v536 = vadd.f32 %v528, 1e-05
      %v537 = vadd.f32 %v529, 1e-05
      %v538 = vadd.f32 %v530, 1e-05
      %v539 = vadd.f32 %v531, 1e-05
      %v540 = vadd.f32 %v532, 1e-05
      %v541 = vadd.f32 %v533, 1e-05
      %v542 = vadd.f32 %v534, 1e-05
      %v543 = vadd.f32 %v535, 1e-05
      %v544 = vrsqrt.pop %v536
      %v545 = vmul.f32 %v544, %v536
      %v546 = vmul.f32 %v545, %v544
      %v547 = vmul.f32 0.5, %v546
      %v548 = vsub.f32 1.5, %v547
      %v549 = vmul.f32 %v544, %v548
      %vm550 = vweird.f32 %v536
      %vm551 = vweird.f32 %v544
      %vm552 = vmor %vm550, %vm551
      %v553 = vsel %vm552, %v544, %v549
      %v554 = vrsqrt.pop %v537
      %v555 = vmul.f32 %v554, %v537
      %v556 = vmul.f32 %v555, %v554
      %v557 = vmul.f32 0.5, %v556
      %v558 = vsub.f32 1.5, %v557
      %v559 = vmul.f32 %v554, %v558
      %vm560 = vweird.f32 %v537
      %vm561 = vweird.f32 %v554
      %vm562 = vmor %vm560, %vm561
      %v563 = vsel %vm562, %v554, %v559
      %v564 = vrsqrt.pop %v538
      %v565 = vmul.f32 %v564, %v538
      %v566 = vmul.f32 %v565, %v564
      %v567 = vmul.f32 0.5, %v566
      %v568 = vsub.f32 1.5, %v567
      %v569 = vmul.f32 %v564, %v568
      %vm570 = vweird.f32 %v538
      %vm571 = vweird.f32 %v564
      %vm572 = vmor %vm570, %vm571
      %v573 = vsel %vm572, %v564, %v569
      %v574 = vrsqrt.pop %v539
      %v575 = vmul.f32 %v574, %v539
      %v576 = vmul.f32 %v575, %v574
      %v577 = vmul.f32 0.5, %v576
      %v578 = vsub.f32 1.5, %v577
      %v579 = vmul.f32 %v574, %v578
      %vm580 = vweird.f32 %v539
      %vm581 = vweird.f32 %v574
      %vm582 = vmor %vm580, %vm581
      %v583 = vsel %vm582, %v574, %v579
      %v584 = vrsqrt.pop %v540
      %v585 = vmul.f32 %v584, %v540
      %v586 = vmul.f32 %v585, %v584
      %v587 = vmul.f32 0.5, %v586
      %v588 = vsub.f32 1.5, %v587
      %v589 = vmul.f32 %v584, %v588
      %vm590 = vweird.f32 %v540
      %vm591 = vweird.f32 %v584
      %vm592 = vmor %vm590, %vm591
      %v593 = vsel %vm592, %v584, %v589
      %v594 = vrsqrt.pop %v541
      %v595 = vmul.f32 %v594, %v541
      %v596 = vmul.f32 %v595, %v594
      %v597 = vmul.f32 0.5, %v596
      %v598 = vsub.f32 1.5, %v597
      %v599 = vmul.f32 %v594, %v598
      %vm600 = vweird.f32 %v541
      %vm601 = vweird.f32 %v594
      %vm602 = vmor %vm600, %vm601
      %v603 = vsel %vm602, %v594, %v599
      %v604 = vrsqrt.pop %v542
      %v605 = vmul.f32 %v604, %v542
      %v606 = vmul.f32 %v605, %v604
      %v607 = vmul.f32 0.5, %v606
      %v608 = vsub.f32 1.5, %v607
      %v609 = vmul.f32 %v604, %v608
      %vm610 = vweird.f32 %v542
      %vm611 = vweird.f32 %v604
      %vm612 = vmor %vm610, %vm611
      %v613 = vsel %vm612, %v604, %v609
      %v614 = vrsqrt.pop %v543
      %v615 = vmul.f32 %v614, %v543
      %v616 = vmul.f32 %v615, %v614
      %v617 = vmul.f32 0.5, %v616
      %v618 = vsub.f32 1.5, %v617
      %v619 = vmul.f32 %v614, %v618
      %vm620 = vweird.f32 %v543
      %vm621 = vweird.f32 %v614
      %vm622 = vmor %vm620, %vm621
      %v623 = vsel %vm622, %v614, %v619
      %v624 = vld [vmem:[%s208] sm:$0xff]
      %v625 = vld [vmem:[%s208 + $0x8] sm:$0xff]
      %v626 = vld [vmem:[%s208 + $0x10] sm:$0xff]
      %v627 = vld [vmem:[%s208 + $0x18] sm:$0xff]
      %v628 = vld [vmem:[%s208 + $0x20] sm:$0xff]
      %v629 = vld [vmem:[%s208 + $0x28] sm:$0xff]
      %v630 = vld [vmem:[%s208 + $0x30] sm:$0xff]
      %v631 = vld [vmem:[%s208 + $0x38] sm:$0xff]
      %v632 = vmul.f32 %v624, %v553
      %v633 = vmul.f32 %v625, %v563
      %v634 = vmul.f32 %v626, %v573
      %v635 = vmul.f32 %v627, %v583
      %v636 = vmul.f32 %v628, %v593
      %v637 = vmul.f32 %v629, %v603
      %v638 = vmul.f32 %v630, %v613
      %v639 = vmul.f32 %v631, %v623
      %v640 = vld [vmem:[%s214] sm:$0xff]
      %v641 = vld [vmem:[%s214 + $0x8] sm:$0xff]
      %v642 = vld [vmem:[%s214 + $0x10] sm:$0xff]
      %v643 = vld [vmem:[%s214 + $0x18] sm:$0xff]
      %v644 = vld [vmem:[%s214 + $0x20] sm:$0xff]
      %v645 = vld [vmem:[%s214 + $0x28] sm:$0xff]
      %v646 = vld [vmem:[%s214 + $0x30] sm:$0xff]
      %v647 = vld [vmem:[%s214 + $0x38] sm:$0xff]
      %v648 = vmul.f32 %v496, %v632
      %v649 = vmul.f32 %v497, %v633
      %v650 = vmul.f32 %v498, %v634
      %v651 = vmul.f32 %v499, %v635
      %v652 = vmul.f32 %v500, %v636
      %v653 = vmul.f32 %v501, %v637
      %v654 = vmul.f32 %v502, %v638
      %v655 = vmul.f32 %v503, %v639
      %v656 = vsub.f32 %v640, %v648
      %v657 = vsub.f32 %v641, %v649
      %v658 = vsub.f32 %v642, %v650
      %v659 = vsub.f32 %v643, %v651
      %v660 = vsub.f32 %v644, %v652
      %v661 = vsub.f32 %v645, %v653
      %v662 = vsub.f32 %v646, %v654
      %v663 = vsub.f32 %v647, %v655
      %665 = vset.pattern.permute.xlu0 0
      %666 = vperm.xlu0 %665, %v632
      %v667 = vpop.permute.xlu0 %666
      %670 = vset.pattern.permute.xlu0 0
      %671 = vperm.xlu0 %670, %v633
      %v672 = vpop.permute.xlu0 %671
      %675 = vset.pattern.permute.xlu0 0
      %676 = vperm.xlu0 %675, %v634
      %v677 = vpop.permute.xlu0 %676
      %680 = vset.pattern.permute.xlu0 0
      %681 = vperm.xlu0 %680, %v635
      %v682 = vpop.permute.xlu0 %681
      %685 = vset.pattern.permute.xlu0 0
      %686 = vperm.xlu0 %685, %v636
      %v687 = vpop.permute.xlu0 %686
      %690 = vset.pattern.permute.xlu0 0
      %691 = vperm.xlu0 %690, %v637
      %v692 = vpop.permute.xlu0 %691
      %695 = vset.pattern.permute.xlu0 0
      %696 = vperm.xlu0 %695, %v638
      %v697 = vpop.permute.xlu0 %696
      %700 = vset.pattern.permute.xlu0 0
      %701 = vperm.xlu0 %700, %v639
      %v702 = vpop.permute.xlu0 %701
      %v704 = vmul.f32 %v223, %v667
      %v705 = vmul.f32 %v224, %v667
      %v706 = vmul.f32 %v225, %v667
      %v707 = vmul.f32 %v226, %v667
      %v708 = vmul.f32 %v227, %v667
      %v709 = vmul.f32 %v228, %v667
      %v710 = vmul.f32 %v229, %v667
      %v711 = vmul.f32 %v230, %v672
      %v712 = vmul.f32 %v231, %v672
      %v713 = vmul.f32 %v232, %v672
      %v714 = vmul.f32 %v233, %v672
      %v715 = vmul.f32 %v234, %v672
      %v716 = vmul.f32 %v235, %v672
      %v717 = vmul.f32 %v236, %v672
      %v718 = vmul.f32 %v237, %v677
      %v719 = vmul.f32 %v238, %v677
      %v720 = vmul.f32 %v239, %v677
      %v721 = vmul.f32 %v240, %v677
      %v722 = vmul.f32 %v241, %v677
      %v723 = vmul.f32 %v242, %v677
      %v724 = vmul.f32 %v243, %v677
      %v725 = vmul.f32 %v244, %v682
      %v726 = vmul.f32 %v245, %v682
      %v727 = vmul.f32 %v246, %v682
      %v728 = vmul.f32 %v247, %v682
      %v729 = vmul.f32 %v248, %v682
      %v730 = vmul.f32 %v249, %v682
      %v731 = vmul.f32 %v250, %v682
      %v732 = vmul.f32 %v251, %v687
      %v733 = vmul.f32 %v252, %v687
      %v734 = vmul.f32 %v253, %v687
      %v735 = vmul.f32 %v254, %v687
      %v736 = vmul.f32 %v255, %v687
      %v737 = vmul.f32 %v256, %v687
      %v738 = vmul.f32 %v257, %v687
      %v739 = vmul.f32 %v258, %v692
      %v740 = vmul.f32 %v259, %v692
      %v741 = vmul.f32 %v260, %v692
      %v742 = vmul.f32 %v261, %v692
      %v743 = vmul.f32 %v262, %v692
      %v744 = vmul.f32 %v263, %v692
      %v745 = vmul.f32 %v264, %v692
      %v746 = vmul.f32 %v265, %v697
      %v747 = vmul.f32 %v266, %v697
      %v748 = vmul.f32 %v267, %v697
      %v749 = vmul.f32 %v268, %v697
      %v750 = vmul.f32 %v269, %v697
      %v751 = vmul.f32 %v270, %v697
      %v752 = vmul.f32 %v271, %v697
      %v753 = vmul.f32 %v272, %v702
      %v754 = vmul.f32 %v273, %v702
      %v755 = vmul.f32 %v274, %v702
      %v756 = vmul.f32 %v275, %v702
      %v757 = vmul.f32 %v276, %v702
      %v758 = vmul.f32 %v277, %v702
      %v759 = vmul.f32 %v278, %v702
      %761 = vset.pattern.permute.xlu0 0
      %762 = vperm.xlu0 %761, %v656
      %v763 = vpop.permute.xlu0 %762
      %766 = vset.pattern.permute.xlu0 0
      %767 = vperm.xlu0 %766, %v657
      %v768 = vpop.permute.xlu0 %767
      %771 = vset.pattern.permute.xlu0 0
      %772 = vperm.xlu0 %771, %v658
      %v773 = vpop.permute.xlu0 %772
      %776 = vset.pattern.permute.xlu0 0
      %777 = vperm.xlu0 %776, %v659
      %v778 = vpop.permute.xlu0 %777
      %781 = vset.pattern.permute.xlu0 0
      %782 = vperm.xlu0 %781, %v660
      %v783 = vpop.permute.xlu0 %782
      %786 = vset.pattern.permute.xlu0 0
      %787 = vperm.xlu0 %786, %v661
      %v788 = vpop.permute.xlu0 %787
      %791 = vset.pattern.permute.xlu0 0
      %792 = vperm.xlu0 %791, %v662
      %v793 = vpop.permute.xlu0 %792
      %796 = vset.pattern.permute.xlu0 0
      %797 = vperm.xlu0 %796, %v663
      %v798 = vpop.permute.xlu0 %797
      %v800 = vadd.f32 %v704, %v763
      %v801 = vadd.f32 %v705, %v763
      %v802 = vadd.f32 %v706, %v763
      %v803 = vadd.f32 %v707, %v763
      %v804 = vadd.f32 %v708, %v763
      %v805 = vadd.f32 %v709, %v763
      %v806 = vadd.f32 %v710, %v763
      %v807 = vadd.f32 %v711, %v768
      %v808 = vadd.f32 %v712, %v768
      %v809 = vadd.f32 %v713, %v768
      %v810 = vadd.f32 %v714, %v768
      %v811 = vadd.f32 %v715, %v768
      %v812 = vadd.f32 %v716, %v768
      %v813 = vadd.f32 %v717, %v768
      %v814 = vadd.f32 %v718, %v773
      %v815 = vadd.f32 %v719, %v773
      %v816 = vadd.f32 %v720, %v773
      %v817 = vadd.f32 %v721, %v773
      %v818 = vadd.f32 %v722, %v773
      %v819 = vadd.f32 %v723, %v773
      %v820 = vadd.f32 %v724, %v773
      %v821 = vadd.f32 %v725, %v778
      %v822 = vadd.f32 %v726, %v778
      %v823 = vadd.f32 %v727, %v778
      %v824 = vadd.f32 %v728, %v778
      %v825 = vadd.f32 %v729, %v778
      %v826 = vadd.f32 %v730, %v778
      %v827 = vadd.f32 %v731, %v778
      %v828 = vadd.f32 %v732, %v783
      %v829 = vadd.f32 %v733, %v783
      %v830 = vadd.f32 %v734, %v783
      %v831 = vadd.f32 %v735, %v783
      %v832 = vadd.f32 %v736, %v783
      %v833 = vadd.f32 %v737, %v783
      %v834 = vadd.f32 %v738, %v783
      %v835 = vadd.f32 %v739, %v788
      %v836 = vadd.f32 %v740, %v788
      %v837 = vadd.f32 %v741, %v788
      %v838 = vadd.f32 %v742, %v788
      %v839 = vadd.f32 %v743, %v788
      %v840 = vadd.f32 %v744, %v788
      %v841 = vadd.f32 %v745, %v788
      %v842 = vadd.f32 %v746, %v793
      %v843 = vadd.f32 %v747, %v793
      %v844 = vadd.f32 %v748, %v793
      %v845 = vadd.f32 %v749, %v793
      %v846 = vadd.f32 %v750, %v793
      %v847 = vadd.f32 %v751, %v793
      %v848 = vadd.f32 %v752, %v793
      %v849 = vadd.f32 %v753, %v798
      %v850 = vadd.f32 %v754, %v798
      %v851 = vadd.f32 %v755, %v798
      %v852 = vadd.f32 %v756, %v798
      %v853 = vadd.f32 %v757, %v798
      %v854 = vadd.f32 %v758, %v798
      %v855 = vadd.f32 %v759, %v798
      %856 = vst [vmem:[%s221] sm:$0xff] %v800
      %857 = vst [vmem:[%s221 + $0x8] sm:$0xff] %v801
      %858 = vst [vmem:[%s221 + $0x10] sm:$0xff] %v802
      %859 = vst [vmem:[%s221 + $0x18] sm:$0xff] %v803
      %860 = vst [vmem:[%s221 + $0x20] sm:$0xff] %v804
      %861 = vst [vmem:[%s221 + $0x28] sm:$0xff] %v805
      %862 = vst.msk [vmem:[%s221 + $0x30] sm:$0xff] %vm284, %v806
      %863 = vst [vmem:[%s221 + $0x38] sm:$0xff] %v807
      %864 = vst [vmem:[%s221 + $0x40] sm:$0xff] %v808
      %865 = vst [vmem:[%s221 + $0x48] sm:$0xff] %v809
      %866 = vst [vmem:[%s221 + $0x50] sm:$0xff] %v810
      %867 = vst [vmem:[%s221 + $0x58] sm:$0xff] %v811
      %868 = vst [vmem:[%s221 + $0x60] sm:$0xff] %v812
      %869 = vst.msk [vmem:[%s221 + $0x68] sm:$0xff] %vm284, %v813
      %870 = vst [vmem:[%s221 + $0x70] sm:$0xff] %v814
      %871 = vst [vmem:[%s221 + $0x78] sm:$0xff] %v815
      %872 = vst [vmem:[%s221 + $0x80] sm:$0xff] %v816
      %873 = vst [vmem:[%s221 + $0x88] sm:$0xff] %v817
      %874 = vst [vmem:[%s221 + $0x90] sm:$0xff] %v818
      %875 = vst [vmem:[%s221 + $0x98] sm:$0xff] %v819
      %876 = vst.msk [vmem:[%s221 + $0xa0] sm:$0xff] %vm284, %v820
      %877 = vst [vmem:[%s221 + $0xa8] sm:$0xff] %v821
      %878 = vst [vmem:[%s221 + $0xb0] sm:$0xff] %v822
      %879 = vst [vmem:[%s221 + $0xb8] sm:$0xff] %v823
      %880 = vst [vmem:[%s221 + $0xc0] sm:$0xff] %v824
      %881 = vst [vmem:[%s221 + $0xc8] sm:$0xff] %v825
      %882 = vst [vmem:[%s221 + $0xd0] sm:$0xff] %v826
      %883 = vst.msk [vmem:[%s221 + $0xd8] sm:$0xff] %vm284, %v827
      %884 = vst [vmem:[%s221 + $0xe0] sm:$0xff] %v828
      %885 = vst [vmem:[%s221 + $0xe8] sm:$0xff] %v829
      %886 = vst [vmem:[%s221 + $0xf0] sm:$0xff] %v830
      %887 = vst [vmem:[%s221 + $0xf8] sm:$0xff] %v831
      %888 = vst [vmem:[%s221 + $0x100] sm:$0xff] %v832
      %889 = vst [vmem:[%s221 + $0x108] sm:$0xff] %v833
      %890 = vst.msk [vmem:[%s221 + $0x110] sm:$0xff] %vm284, %v834
      %891 = vst [vmem:[%s221 + $0x118] sm:$0xff] %v835
      %892 = vst [vmem:[%s221 + $0x120] sm:$0xff] %v836
      %893 = vst [vmem:[%s221 + $0x128] sm:$0xff] %v837
      %894 = vst [vmem:[%s221 + $0x130] sm:$0xff] %v838
      %895 = vst [vmem:[%s221 + $0x138] sm:$0xff] %v839
      %896 = vst [vmem:[%s221 + $0x140] sm:$0xff] %v840
      %897 = vst.msk [vmem:[%s221 + $0x148] sm:$0xff] %vm284, %v841
      %898 = vst [vmem:[%s221 + $0x150] sm:$0xff] %v842
      %899 = vst [vmem:[%s221 + $0x158] sm:$0xff] %v843
      %900 = vst [vmem:[%s221 + $0x160] sm:$0xff] %v844
      %901 = vst [vmem:[%s221 + $0x168] sm:$0xff] %v845
      %902 = vst [vmem:[%s221 + $0x170] sm:$0xff] %v846
      %903 = vst [vmem:[%s221 + $0x178] sm:$0xff] %v847
      %904 = vst.msk [vmem:[%s221 + $0x180] sm:$0xff] %vm284, %v848
      %905 = vst [vmem:[%s221 + $0x188] sm:$0xff] %v849
      %906 = vst [vmem:[%s221 + $0x190] sm:$0xff] %v850
      %907 = vst [vmem:[%s221 + $0x198] sm:$0xff] %v851
      %908 = vst [vmem:[%s221 + $0x1a0] sm:$0xff] %v852
      %909 = vst [vmem:[%s221 + $0x1a8] sm:$0xff] %v853
      %910 = vst [vmem:[%s221 + $0x1b0] sm:$0xff] %v854
      %911 = vst.msk [vmem:[%s221 + $0x1b8] sm:$0xff] %vm284, %v855
      %s912 = smul.u32 8, %s14
      %p913 = scmp.lt.s32.totalorder %s912, 71
      %s914 = scalar_select %p913, %s912, 71
      %s915 = smul.addr %s914, 7
      %s916 = smul.addr %s915, 8
      %s917 = scalar_lea.vmem %s3, %s916
      // Predicated region
      $region33: #{tpu_custom_call.1} parent=31 // pred_check
        %p918 = pneg %p110
      $region34: #{tpu_custom_call.1} parent=31 // pred_check_branch
        %920 = sbr.rel (%p918) target = $region36
      $region35: #{tpu_custom_call.1} parent=31 // pred_region
        %s921 = smul.u32 8, %s14
      $region36: #{tpu_custom_call.1} parent=31 // pred_fallthru
        _
    $region32: #{tpu_custom_call.1} parent=5 // pred_fallthru
      _
    %p922 = scmp.le.s32.totalorder 2, %s9
    // Predicated region
    $region37: #{tpu_custom_call.1} parent=5 // pred_check
      %p923 = pneg %p922
    $region38: #{tpu_custom_call.1} parent=5 // pred_check_branch
      %925 = sbr.rel (%p923) target = $region40
    $region39: #{tpu_custom_call.1} parent=5 // pred_region
      %s926 = ssub.s32 %s9, 2
      // Predicated region
      $region41: #{tpu_custom_call.1} parent=39 // pred_check
        %p927 = pneg %p116
      $region42: #{tpu_custom_call.1} parent=39 // pred_check_branch
        %929 = sbr.rel (%p927) target = $region44
      $region43: #{tpu_custom_call.1} parent=39 // pred_region
        %s930 = smul.u32 8, %s15
        %p931 = scmp.lt.s32.totalorder %s930, 71
        %s932 = scalar_select %p931, %s930, 71
        %s933 = smul.addr %s932, 7
        %s934 = smul.addr %s933, 8
        %s935 = scalar_lea.vmem %s3, %s934
      $region44: #{tpu_custom_call.1} parent=39 // pred_fallthru
        _
    $region40: #{tpu_custom_call.1} parent=5 // pred_fallthru
      _
  $region6: #{tpu_custom_call.1} parent=0 // loop_footer
    %s13 = sadd.s32 1, %s9
  $region7: #{tpu_custom_call.1} parent=0 // loop_footer_branch
    %8 = sbr.rel target = $region3
  $region8: #{tpu_custom_call.1} parent=0 // loop_exit
    _

</llo_original>
